<compile_context>
chip_gen: v7x
topology: tpu7x:2x2x1
jax: 0.10.0
libtpu: 0.0.40
codegen_flags: <defaults>
</compile_context>

<pallas_src>
import functools

import jax
import jax.numpy as jnp
from jax.experimental import pallas as pl
from jax.experimental.pallas import tpu as pltpu

_LANE = 128
_SUBLANE = 8


def _pair_reduce_kernel(a_ref, b_ref, o_ref, *, op):
    """One grid step: diff -> (squared | abs) -> VPU-only partial sum into an (8,128) tile."""
    d = a_ref[...].astype(jnp.float32) - b_ref[...].astype(jnp.float32)
    part = d * d if op == "sq" else jnp.abs(d)
    # (block_rows, 128) -> (block_rows//8, 8, 128) is tile-aligned (free); the axis-0 sum
    # is plain vreg adds on the VPU, which has ample slack under the streaming DMA.
    o_ref[...] = jnp.sum(part.reshape(-1, _SUBLANE, _LANE), axis=0)


def _pair_sum_slab(a2d, b2d, *, op, block_rows):
    """Sum of (a-b)^2 or |a-b| over a (rows, 128) slab; rows % block_rows == 0."""
    rows = a2d.shape[0]
    assert rows % block_rows == 0 and block_rows % _SUBLANE == 0
    num_blocks = rows // block_rows
    kernel = functools.partial(_pair_reduce_kernel, op=op)

    partials = pl.pallas_call(
        kernel,
        out_shape=jax.ShapeDtypeStruct((num_blocks, _SUBLANE, _LANE), jnp.float32),
        grid_spec=pltpu.PrefetchScalarGridSpec(
            num_scalar_prefetch=0,
            grid=(num_blocks,),
            in_specs=[
                pl.BlockSpec((block_rows, _LANE), lambda i: (i, 0)),
                pl.BlockSpec((block_rows, _LANE), lambda i: (i, 0)),
            ],
            # Leading dim squeezed: kernel writes an (8,128) partial per grid step.
            out_specs=pl.BlockSpec((None, _SUBLANE, _LANE), lambda i: (i, 0, 0)),
        ),
        compiler_params=pltpu.CompilerParams(
            dimension_semantics=("parallel",),  # independent blocks -> megacore on v7x
        ),
    )(a2d, b2d)

    return jnp.sum(partials)  # one small final cross-lane reduce outside the hot loop


def _pair_reduce_mean(a, b, *, op, tile_rows=2048):
    """mean((a-b)^2) if op=='sq', mean(|a-b|) if op=='abs'; accumulation in f32."""
    assert a.shape == b.shape, "inputs must have identical shapes"
    n = a.size
    a_flat = jnp.ravel(a)  # native dtype; upcast happens inside the kernel
    b_flat = jnp.ravel(b)
    chunk = tile_rows * _LANE

    if n >= chunk:
        # Tiled path: zero-copy reshape of the chunk-aligned prefix, large blocks.
        n_main = (n // chunk) * chunk
        rows = n_main // _LANE
        a_main = a_flat if n_main == n else a_flat[:n_main]
        b_main = b_flat if n_main == n else b_flat[:n_main]
        total = _pair_sum_slab(
            a_main.reshape(rows, _LANE),
            b_main.reshape(rows, _LANE),
            op=op,
            block_rows=tile_rows,
        )
        if n_main < n:
            # Small tail (< one chunk): plain-JAX reduce; avoids re-copying the full array.
            d = a_flat[n_main:].astype(jnp.float32) - b_flat[n_main:].astype(jnp.float32)
            tail = jnp.sum(d * d) if op == "sq" else jnp.sum(jnp.abs(d))
            total = total + tail
    else:
        # Small-input path: single block == whole slab, grid of 1 (no per-step overhead).
        sub = _SUBLANE * _LANE
        padded = ((n + sub - 1) // sub) * sub
        pad = padded - n
        a2 = jnp.pad(a_flat, (0, pad)).reshape(padded // _LANE, _LANE)
        b2 = jnp.pad(b_flat, (0, pad)).reshape(padded // _LANE, _LANE)
        # Identical zero padding contributes 0 to both squared and absolute diffs.
        total = _pair_sum_slab(a2, b2, op=op, block_rows=padded // _LANE)

    return total / jnp.float32(n)  # mean over the TRUE element count


def latent_loss(real_features, generated_features,
                average_dlatents=None, dlatents=None, *, tile_rows=2048):
    """JAX/Pallas equivalent of LatentLoss.forward."""
    loss = _pair_reduce_mean(real_features, generated_features, op="sq",
                             tile_rows=tile_rows)
    if average_dlatents is not None and dlatents is not None:
        loss = loss + 512.0 * _pair_reduce_mean(average_dlatents, dlatents, op="abs",
                                                tile_rows=tile_rows)
    return loss


if __name__ == "__main__":
    key = jax.random.PRNGKey(0)
    k1, k2, k3, k4, k5, k6 = jax.random.split(key, 6)

    # Small, module-typical shapes: feature maps + dlatents.
    real = jax.random.normal(k1, (2, 4, 16, 16), dtype=jnp.float32)
    gen = jax.random.normal(k2, (2, 4, 16, 16), dtype=jnp.float32)
    avg_dl = jax.random.normal(k3, (2, 8, 32), dtype=jnp.float32)
    dl = jax.random.normal(k4, (2, 8, 32), dtype=jnp.float32)

    # 1) MSE-only call.
    loss_l2 = jax.block_until_ready(latent_loss(real, gen))
    ref_l2 = jnp.mean(jnp.square(real - gen))
    assert jnp.allclose(loss_l2, ref_l2, rtol=1e-5, atol=1e-6), (loss_l2, ref_l2)

    # 2) Full call with the 512 * L1(dlatents) term.
    loss_full = jax.block_until_ready(latent_loss(real, gen, avg_dl, dl))
    ref_full = ref_l2 + 512.0 * jnp.mean(jnp.abs(avg_dl - dl))
    assert jnp.allclose(loss_full, ref_full, rtol=1e-5, atol=1e-6), (loss_full, ref_full)

    # 3) Medium bf16 input exercising the multi-block tiled path + plain-JAX tail
    #    (native-dtype streaming, no wrapper f32 cast / no full-array pad).
    a = jax.random.normal(k5, (2, 2048, 130), dtype=jnp.bfloat16)
    b = jax.random.normal(k6, (2, 2048, 130), dtype=jnp.bfloat16)
    loss_big = jax.block_until_ready(latent_loss(a, b))
    d = a.astype(jnp.float32) - b.astype(jnp.float32)
    ref_big = jnp.mean(d * d)
    assert jnp.allclose(loss_big, ref_big, rtol=1e-4, atol=1e-6), (loss_big, ref_big)

    print("KERNEL_OK")
</pallas_src>

<mosaic_0001>
module attributes {stable_mosaic.version = 11 : i64} {
  func.func @_pair_reduce_kernel(%arg0: i32, %arg1: memref<16x128xf32, #tpu.memory_space<vmem>>, %arg2: memref<16x128xf32, #tpu.memory_space<vmem>>, %arg3: memref<1x8x128xf32, #tpu.memory_space<vmem>>) attributes {dimension_semantics = [#tpu.dimension_semantics<parallel>], iteration_bounds = array<i64: 1>, scalar_prefetch = 0 : i64, scratch_operands = 0 : i64, tpu.core_type = #tpu.core_type<tc>, window_params = [{transform_indices = @transform_0, window_bounds = array<i64: 16, 128>}, {transform_indices = @transform_1, window_bounds = array<i64: 16, 128>}, {transform_indices = @transform_2, window_bounds = array<i64: 1, 8, 128>}]} {
    %c0 = arith.constant 0 : index
    %c0_0 = arith.constant 0 : index
    %0 = vector.load %arg1[%c0, %c0_0] : memref<16x128xf32, #tpu.memory_space<vmem>>, vector<16x128xf32>
    %c0_1 = arith.constant 0 : index
    %c0_2 = arith.constant 0 : index
    %1 = vector.load %arg2[%c0_1, %c0_2] : memref<16x128xf32, #tpu.memory_space<vmem>>, vector<16x128xf32>
    %2 = arith.subf %0, %1 : vector<16x128xf32>
    %3 = arith.mulf %2, %2 : vector<16x128xf32>
    %4 = vector.shape_cast %3 : vector<16x128xf32> to vector<2x8x128xf32>
    %cst = arith.constant dense<0.000000e+00> : vector<8x128xf32>
    %5 = vector.multi_reduction <add>, %4, %cst [0] : vector<2x8x128xf32> to vector<8x128xf32>
    %c0_3 = arith.constant 0 : index
    %c0_4 = arith.constant 0 : index
    %c0_5 = arith.constant 0 : index
    %6 = vector.load %arg3[%c0_3, %c0_4, %c0_5] : memref<1x8x128xf32, #tpu.memory_space<vmem>>, vector<1x8x128xf32>
    %7 = vector.shape_cast %6 : vector<1x8x128xf32> to vector<8x128xf32>
    %8 = vector.shape_cast %5 : vector<8x128xf32> to vector<1x8x128xf32>
    tpu.vector_store %arg3[%c0_3, %c0_4, %c0_5], %8 {strides = array<i32>} : memref<1x8x128xf32, #tpu.memory_space<vmem>>, vector<1x8x128xf32>,
    return
  }
  func.func @transform_0(%arg0: i32) -> (i32, i32) {
    %c0_i32 = arith.constant 0 : i32
    %c0_i32_0 = arith.constant 0 : i32
    return %arg0, %c0_i32 : i32, i32
  }
  func.func @transform_1(%arg0: i32) -> (i32, i32) {
    %c0_i32 = arith.constant 0 : i32
    %c0_i32_0 = arith.constant 0 : i32
    return %arg0, %c0_i32 : i32, i32
  }
  func.func @transform_2(%arg0: i32) -> (i32, i32, i32) {
    %c0_i32 = arith.constant 0 : i32
    %c0_i32_0 = arith.constant 0 : i32
    %c0_i32_1 = arith.constant 0 : i32
    return %arg0, %c0_i32, %c0_i32_0 : i32, i32, i32
  }
}

</mosaic_0001>

<llo_original>
// kernel: tpu_custom_call.1
$region0: #{tpu_custom_call.1}
  #allocation0 [shape = 'u32[]', space=smem, size = 0x4, offset = 0x4, fixed_abs, tag = 'smem constant byte address 0x4 - core index']
  #allocation1 [shape = 'u32[144,128]{1,0:T(1,128)}', space=vmem, size = 0x12000, scoped, tag = 'internal scratch']
  %s0 = inlined_call_operand.hbm [shape: f32[16,128], index: 0, kind: input, shape index: {}]
  %s1 = inlined_call_operand.hbm [shape: f32[16,128], index: 1, kind: input, shape index: {}]
  %s2 = inlined_call_operand.hbm [shape: f32[1,8,128], index: 2, kind: output, shape index: {}]
  %s3 = sld [smem:[#allocation0]]
  $region26: #{tpu_custom_call.1} parent=0
    _
  %s5 = ssub.s32 1, %s3
  %s6 = scalar_select 0, %s5, %s3
  $region1: #{tpu_custom_call.1} parent=0
    #allocation2 [shape = 'u8[8192]{0}', space=vmem, size = 0x2000, scoped, tag = 'input window, operand 0, single buffered']
    #allocation3 [shape = 's32[1]{0}', space=sflag, size = 0x4, scoped, tag = 'scoped memory for tpu_custom_call.1']
    #allocation4 [shape = 's32[1]{0}', space=sflag, size = 0x4, scoped, tag = 'scoped memory for tpu_custom_call.1']
    #allocation5 [shape = 'u8[8192]{0}', space=vmem, size = 0x2000, scoped, tag = 'input window, operand 1, single buffered']
    #allocation6 [shape = 's32[1]{0}', space=sflag, size = 0x4, scoped, tag = 'scoped memory for tpu_custom_call.1']
    #allocation7 [shape = 'u8[4096]{0}', space=vmem, size = 0x1000, scoped, tag = 'output window, operand 0, single buffered']
    %7 = vsyncpa [#allocation3], 0
    %8 = vsyncpa [#allocation6], 0
    %9 = vsyncpa [#allocation4], 0
    // Predicated region
    $region2: #{tpu_custom_call.1} parent=1 // pred_check
      _
    $region3: #{tpu_custom_call.1} parent=1 // pred_check_branch
      %11 = sbr.rel (0) target = $region5
    $region4: #{tpu_custom_call.1} parent=1 // pred_region
      %s13 = ssub.s32 256, 256
      %14 = vsyncadd [#allocation3], %s13
      %s15 = sshll.u32 [#allocation2], 4
      %s16 = int_to_ptr.vmem [resolvable:$true] %s15
      %21 = dma.hbm_to_vmem [thread:$0]  %s0, 256, %s16, [#allocation3], 128, 128, 8
    $region5: #{tpu_custom_call.1} parent=1 // pred_fallthru
      _
    // Predicated region
    $region6: #{tpu_custom_call.1} parent=1 // pred_check
      _
    $region7: #{tpu_custom_call.1} parent=1 // pred_check_branch
      %23 = sbr.rel (0) target = $region9
    $region8: #{tpu_custom_call.1} parent=1 // pred_region
      %s25 = ssub.s32 256, 256
      %26 = vsyncadd [#allocation6], %s25
      %s27 = sshll.u32 [#allocation5], 4
      %s28 = int_to_ptr.vmem [resolvable:$true] %s27
      %33 = dma.hbm_to_vmem [thread:$0]  %s1, 256, %s28, [#allocation6], 128, 128, 8
    $region9: #{tpu_custom_call.1} parent=1 // pred_fallthru
      _
    // Predicated region
    $region10: #{tpu_custom_call.1} parent=1 // pred_check
      _
    $region11: #{tpu_custom_call.1} parent=1 // pred_check_branch
      %35 = sbr.rel (0) target = $region13
    $region12: #{tpu_custom_call.1} parent=1 // pred_region
      %36 = dma.done [#allocation3], 256
    $region13: #{tpu_custom_call.1} parent=1 // pred_fallthru
      _
    // Predicated region
    $region14: #{tpu_custom_call.1} parent=1 // pred_check
      _
    $region15: #{tpu_custom_call.1} parent=1 // pred_check_branch
      %38 = sbr.rel (0) target = $region17
    $region16: #{tpu_custom_call.1} parent=1 // pred_region
      %39 = dma.done [#allocation6], 256
    $region17: #{tpu_custom_call.1} parent=1 // pred_fallthru
      _
    %v40 = vld [vmem:[#allocation2] sm:$0xff]
    %v41 = vld [vmem:[#allocation2 + $0x8] sm:$0xff]
    %v42 = vld [vmem:[#allocation5] sm:$0xff]
    %v43 = vld [vmem:[#allocation5 + $0x8] sm:$0xff]
    %v44 = vsub.f32 %v40, %v42
    %v45 = vsub.f32 %v41, %v43
    %v46 = vmul.f32 %v44, %v44
    %v47 = vmul.f32 %v45, %v45
    %v48 = vadd.f32 %v46, %v47
    %49 = vst [vmem:[#allocation7] sm:$0xff] %v48
    // Predicated region
    $region18: #{tpu_custom_call.1} parent=1 // pred_check
      _
    $region19: #{tpu_custom_call.1} parent=1 // pred_check_branch
      %51 = sbr.rel (0) target = $region21
    $region20: #{tpu_custom_call.1} parent=1 // pred_region
      %s53 = ssub.s32 128, 128
      %54 = vsyncadd [#allocation4], %s53
      %s56 = sshll.u32 [#allocation7], 4
      %s57 = int_to_ptr.vmem [resolvable:$true] %s56
      %59 = dma.vmem_to_hbm [thread:$0]  %s57, 128, %s2, [#allocation4]
    $region21: #{tpu_custom_call.1} parent=1 // pred_fallthru
      _
    // Predicated region
    $region22: #{tpu_custom_call.1} parent=1 // pred_check
      _
    $region23: #{tpu_custom_call.1} parent=1 // pred_check_branch
      %61 = sbr.rel (0) target = $region25
    $region24: #{tpu_custom_call.1} parent=1 // pred_region
      %62 = dma.done [#allocation4], 128
    $region25: #{tpu_custom_call.1} parent=1 // pred_fallthru
      _
    %63 = vsyncpa [#allocation3], 1
    %64 = vsyncpa [#allocation6], 1
    %65 = vsyncpa [#allocation4], 1

</llo_original>
